<compile_context>
chip_gen: v7x
topology: tpu7x:2x2x1
jax: 0.10.0
libtpu: 0.0.40
codegen_flags: <defaults>
</compile_context>

<pallas_src>
import functools

import jax
import jax.numpy as jnp
from jax import lax
from jax.experimental import pallas as pl
from jax.experimental.pallas import tpu as pltpu

VOCAB_SIZE = 128       # small, lane-dense stand-in for the original 10000
EMBEDDING_DIM = 128
HIDDEN_DIM = 256
BATCH = 32
HUFFMAN_TREE = {0: [0, 1], 1: [1, 0], 2: [0, 0, 1], 3: [1, 1, 0]}
MAX_PATH = 3
PAD_P = 128            # lane-padded width of the packed hierarchical-softmax logits
N_TREE_PAD = 8         # sublane-padded number of huffman-tree rows

assert len(HUFFMAN_TREE) * MAX_PATH <= PAD_P
assert max(HUFFMAN_TREE) < N_TREE_PAD
assert max(len(p) for p in HUFFMAN_TREE.values()) <= MAX_PATH


def skipgram_loss_kernel(center_ref, target_ref, emb_ref, w1_ref, b1_ref,
                         wout_ref, tsel_ref, loss_ref):
    B = center_ref.shape[0]
    V = emb_ref.shape[0]
    n_pad = tsel_ref.shape[0]

    c = center_ref[...]  # (B, 1) int32
    t = target_ref[...]  # (B, 1) int32

    # Fused embedding gather: one-hot (B, V) @ emb (V, E) on the MXU.
    onehot_c = (lax.broadcasted_iota(jnp.int32, (B, V), 1) == c).astype(jnp.float32)
    x = jnp.dot(onehot_c, emb_ref[...], preferred_element_type=jnp.float32)  # (B, E)

    # hidden = relu(x @ W1 + b1): bf16 MXU operands, f32 accumulate/elementwise.
    hidden = jnp.dot(x.astype(jnp.bfloat16), w1_ref[...],
                     preferred_element_type=jnp.float32)
    hidden = jnp.maximum(hidden + b1_ref[...], 0.0)                          # (B, H)

    # Logits for every huffman-path bit of every tree word, packed on lanes.
    z = jnp.dot(hidden.astype(jnp.bfloat16), wout_ref[...],
                preferred_element_type=jnp.float32)                          # (B, P)

    # Fused per-batch target-bit / path-weight selection: ONE one-hot matmul
    # against the stacked [targets | weights] table. Rows whose target id is
    # not a huffman-tree word select an all-zero row -> contribute 0.
    onehot_t = (lax.broadcasted_iota(jnp.int32, (B, n_pad), 1) == t).astype(jnp.float32)
    sel = jnp.dot(onehot_t, tsel_ref[...], preferred_element_type=jnp.float32)
    tgt = sel[:, :PAD_P]          # path bits (0/1), zero off-path
    wgt = sel[:, PAD_P:]          # 1/len(path) on the path bits, zero elsewhere

    # Numerically stable binary_cross_entropy_with_logits:
    #   bce(z, t) = max(z, 0) - z*t + softplus(-|z|)       (single EUP form)
    bce = jnp.maximum(z, 0.0) - z * tgt + jax.nn.softplus(-jnp.abs(z))

    # Masked reduction == per-word mean BCE summed over the batch.
    loss_ref[0, 0] = jnp.sum(bce * wgt) / jnp.float32(B)


def init_params(key):
    k = jax.random.split(key, 4)
    emb = jax.random.normal(k[0], (VOCAB_SIZE, EMBEDDING_DIM), jnp.float32)
    w1 = (jax.random.normal(k[1], (EMBEDDING_DIM, HIDDEN_DIM), jnp.float32)
          / jnp.sqrt(jnp.float32(EMBEDDING_DIM))).astype(jnp.bfloat16)
    b1 = jax.random.normal(k[2], (1, HIDDEN_DIM), jnp.float32) * 0.01
    # Pack the per-word (len(path), H) bias-free Linear layers into (H, PAD_P)
    # and the per-word target bits / 1/len(path) masks into one stacked table.
    wout = jnp.zeros((HIDDEN_DIM, PAD_P), jnp.float32)
    tree_table = jnp.zeros((N_TREE_PAD, 2 * PAD_P), jnp.float32)
    wkeys = jax.random.split(k[3], len(HUFFMAN_TREE))
    for w, path in HUFFMAN_TREE.items():
        L = len(path)
        Ww = jax.random.normal(wkeys[w], (HIDDEN_DIM, L), jnp.float32) / jnp.sqrt(
            jnp.float32(HIDDEN_DIM))
        c0 = w * MAX_PATH
        wout = wout.at[:, c0:c0 + L].set(Ww)
        tree_table = tree_table.at[w, c0:c0 + L].set(jnp.asarray(path, jnp.float32))
        tree_table = tree_table.at[w, PAD_P + c0:PAD_P + c0 + L].set(1.0 / L)
    return emb, w1, b1, wout.astype(jnp.bfloat16), tree_table


@jax.jit
def skipgram_forward(center_word, target_words, params):
    emb, w1, b1, wout, tree_table = params
    B = center_word.shape[0]
    c2 = center_word.reshape(B, 1).astype(jnp.int32)
    t2 = target_words.reshape(B, 1).astype(jnp.int32)

    flops = 2 * B * (VOCAB_SIZE * EMBEDDING_DIM          # one-hot gather
                     + EMBEDDING_DIM * HIDDEN_DIM        # hidden layer
                     + HIDDEN_DIM * PAD_P                # packed h-softmax logits
                     + N_TREE_PAD * 2 * PAD_P)           # stacked target/weight select
    bytes_accessed = sum(int(a.size) * a.dtype.itemsize
                         for a in (c2, t2, emb, w1, b1, wout, tree_table)) + 4

    vmem = functools.partial(pl.BlockSpec, memory_space=pltpu.MemorySpace.VMEM)
    smem = pl.BlockSpec(memory_space=pltpu.MemorySpace.SMEM)
    loss = pl.pallas_call(
        skipgram_loss_kernel,
        out_shape=jax.ShapeDtypeStruct((1, 1), jnp.float32),
        in_specs=[vmem()] * 7,
        out_specs=smem,
        compiler_params=pltpu.CompilerParams(vmem_limit_bytes=32 * 1024 * 1024),
        cost_estimate=pl.CostEstimate(flops=flops,
                                      transcendentals=2 * B * PAD_P,
                                      bytes_accessed=bytes_accessed),
    )(c2, t2, emb, w1, b1, wout, tree_table)
    return loss[0, 0]


def reference_forward(center_word, target_words, params):
    """Eager pure-JAX / Python oracle mirroring the intended PyTorch forward."""
    emb, w1, b1, wout, _ = params
    x = jnp.take(emb, center_word, axis=0)
    hidden = jnp.maximum(x @ w1.astype(jnp.float32) + b1, 0.0)
    total = jnp.float32(0.0)
    B = center_word.shape[0]
    for i in range(B):
        w = int(target_words[i])
        if w in HUFFMAN_TREE:
            path = HUFFMAN_TREE[w]
            L = len(path)
            Ww = wout[:, w * MAX_PATH:w * MAX_PATH + L].astype(jnp.float32)  # (H, L)
            z = hidden[i] @ Ww
            tv = jnp.asarray(path, jnp.float32)
            bce = jnp.maximum(z, 0.0) - z * tv + jnp.log1p(jnp.exp(-jnp.abs(z)))
            total = total + jnp.mean(bce)
    return total / B


if __name__ == "__main__":
    key = jax.random.PRNGKey(0)
    pkey, ckey, tkey = jax.random.split(key, 3)
    params = init_params(pkey)
    center_word = jax.random.randint(ckey, (BATCH,), 0, VOCAB_SIZE, dtype=jnp.int32)
    # Draw targets from a small range so some land inside the huffman tree and
    # some land outside (both inside and beyond the padded tree rows).
    target_words = jax.random.randint(tkey, (BATCH,), 0, 12, dtype=jnp.int32)

    loss = jax.block_until_ready(skipgram_forward(center_word, target_words, params))
    ref = reference_forward(center_word, target_words, params)
    assert jnp.isfinite(loss), loss
    # bf16 MXU operands (f32 accumulation) vs. the f32 oracle -> slightly
    # looser tolerance than a pure-f32 comparison.
    assert jnp.allclose(loss, ref, rtol=2e-2, atol=2e-2), (loss, ref)
    print("KERNEL_OK")
</pallas_src>

<mosaic_0001>
module attributes {stable_mosaic.version = 11 : i64} {
  func.func @skipgram_loss_kernel(%arg0: memref<32x1xi32, #tpu.memory_space<vmem>>, %arg1: memref<32x1xi32, #tpu.memory_space<vmem>>, %arg2: memref<128x128xf32, #tpu.memory_space<vmem>>, %arg3: memref<128x256xbf16, #tpu.memory_space<vmem>>, %arg4: memref<1x256xf32, #tpu.memory_space<vmem>>, %arg5: memref<256x128xbf16, #tpu.memory_space<vmem>>, %arg6: memref<8x256xf32, #tpu.memory_space<vmem>>, %arg7: memref<1x1xf32, #tpu.memory_space<smem>>) attributes {dimension_semantics = [], scalar_prefetch = 0 : i64, scratch_operands = 0 : i64, tpu.core_type = #tpu.core_type<tc>} {
    %c0 = arith.constant 0 : index
    %c0_0 = arith.constant 0 : index
    %0 = vector.load %arg0[%c0, %c0_0] : memref<32x1xi32, #tpu.memory_space<vmem>>, vector<32x1xi32>
    %c0_1 = arith.constant 0 : index
    %c0_2 = arith.constant 0 : index
    %1 = vector.load %arg1[%c0_1, %c0_2] : memref<32x1xi32, #tpu.memory_space<vmem>>, vector<32x1xi32>
    %2 = tpu.iota {dimensions = array<i32: 1>} : vector<32x128xi32>
    %3 = vector.broadcast %0 : vector<32x1xi32> to vector<32x128xi32>
    %4 = arith.cmpi eq, %2, %3 : vector<32x128xi32>
    %5 = arith.extui %4 : vector<32x128xi1> to vector<32x128xi32>
    %6 = arith.sitofp %5 : vector<32x128xi32> to vector<32x128xf32>
    %c0_3 = arith.constant 0 : index
    %c0_4 = arith.constant 0 : index
    %7 = vector.load %arg2[%c0_3, %c0_4] : memref<128x128xf32, #tpu.memory_space<vmem>>, vector<128x128xf32>
    %cst = arith.constant dense<0.000000e+00> : vector<32x128xf32>
    %8 = tpu.matmul %6, %7, %cst {dimension_numbers = #tpu.dot_dimension_numbers<[1], [0], [0], [1], [0, 0, 1, 1], [], []>} : vector<32x128xf32>, vector<128x128xf32>, vector<32x128xf32> -> vector<32x128xf32>
    %9 = arith.truncf %8 : vector<32x128xf32> to vector<32x128xbf16>
    %c0_5 = arith.constant 0 : index
    %c0_6 = arith.constant 0 : index
    %10 = vector.load %arg3[%c0_5, %c0_6] : memref<128x256xbf16, #tpu.memory_space<vmem>>, vector<128x256xbf16>
    %cst_7 = arith.constant dense<0.000000e+00> : vector<32x256xf32>
    %11 = tpu.matmul %9, %10, %cst_7 {dimension_numbers = #tpu.dot_dimension_numbers<[1], [0], [0], [1], [0, 0, 1, 1], [], []>} : vector<32x128xbf16>, vector<128x256xbf16>, vector<32x256xf32> -> vector<32x256xf32>
    %c0_8 = arith.constant 0 : index
    %c0_9 = arith.constant 0 : index
    %12 = vector.load %arg4[%c0_8, %c0_9] : memref<1x256xf32, #tpu.memory_space<vmem>>, vector<1x256xf32>
    %13 = vector.broadcast %12 : vector<1x256xf32> to vector<32x256xf32>
    %14 = arith.addf %11, %13 : vector<32x256xf32>
    %cst_10 = arith.constant 0.000000e+00 : f32
    %15 = vector.broadcast %cst_10 : f32 to vector<32x256xf32>
    %16 = arith.maximumf %14, %15 : vector<32x256xf32>
    %17 = arith.truncf %16 : vector<32x256xf32> to vector<32x256xbf16>
    %c0_11 = arith.constant 0 : index
    %c0_12 = arith.constant 0 : index
    %18 = vector.load %arg5[%c0_11, %c0_12] : memref<256x128xbf16, #tpu.memory_space<vmem>>, vector<256x128xbf16>
    %cst_13 = arith.constant dense<0.000000e+00> : vector<32x128xf32>
    %19 = tpu.matmul %17, %18, %cst_13 {dimension_numbers = #tpu.dot_dimension_numbers<[1], [0], [0], [1], [0, 0, 1, 1], [], []>} : vector<32x256xbf16>, vector<256x128xbf16>, vector<32x128xf32> -> vector<32x128xf32>
    %20 = tpu.iota {dimensions = array<i32: 1>} : vector<32x8xi32>
    %21 = vector.broadcast %1 : vector<32x1xi32> to vector<32x8xi32>
    %22 = arith.cmpi eq, %20, %21 : vector<32x8xi32>
    %23 = arith.extui %22 : vector<32x8xi1> to vector<32x8xi32>
    %24 = arith.sitofp %23 : vector<32x8xi32> to vector<32x8xf32>
    %c0_14 = arith.constant 0 : index
    %c0_15 = arith.constant 0 : index
    %25 = vector.load %arg6[%c0_14, %c0_15] : memref<8x256xf32, #tpu.memory_space<vmem>>, vector<8x256xf32>
    %cst_16 = arith.constant dense<0.000000e+00> : vector<32x256xf32>
    %26 = tpu.matmul %24, %25, %cst_16 {dimension_numbers = #tpu.dot_dimension_numbers<[1], [0], [0], [1], [0, 0, 1, 1], [], []>} : vector<32x8xf32>, vector<8x256xf32>, vector<32x256xf32> -> vector<32x256xf32>
    %27 = vector.extract_strided_slice %26 {offsets = [0, 0], sizes = [32, 128], strides = [1, 1]} : vector<32x256xf32> to vector<32x128xf32>
    %28 = vector.extract_strided_slice %26 {offsets = [0, 128], sizes = [32, 128], strides = [1, 1]} : vector<32x256xf32> to vector<32x128xf32>
    %cst_17 = arith.constant 0.000000e+00 : f32
    %29 = vector.broadcast %cst_17 : f32 to vector<32x128xf32>
    %30 = arith.maximumf %19, %29 : vector<32x128xf32>
    %31 = arith.mulf %19, %27 : vector<32x128xf32>
    %32 = arith.subf %30, %31 : vector<32x128xf32>
    %33 = math.absf %19 : vector<32x128xf32>
    %cst_18 = arith.constant 0.000000e+00 : f32
    %34 = vector.broadcast %cst_18 : f32 to vector<32x128xf32>
    %35 = arith.subf %34, %33 : vector<32x128xf32>
    %cst_19 = arith.constant 0.000000e+00 : f32
    %36 = vector.broadcast %cst_19 : f32 to vector<32x128xf32>
    %37 = arith.maximumf %35, %36 : vector<32x128xf32>
    %38 = vector.broadcast %cst_19 : f32 to vector<32x128xf32>
    %39 = arith.subf %35, %38 : vector<32x128xf32>
    %40 = arith.cmpf one, %39, %39 : vector<32x128xf32>
    %41 = vector.broadcast %cst_19 : f32 to vector<32x128xf32>
    %42 = arith.addf %35, %41 : vector<32x128xf32>
    %43 = math.absf %39 : vector<32x128xf32>
    %cst_20 = arith.constant 0.000000e+00 : f32
    %44 = vector.broadcast %cst_20 : f32 to vector<32x128xf32>
    %45 = arith.subf %44, %43 : vector<32x128xf32>
    %46 = math.exp %45 : vector<32x128xf32>
    %47 = math.log1p %46 : vector<32x128xf32>
    %48 = arith.addf %37, %47 : vector<32x128xf32>
    %49 = arith.select %40, %42, %48 : vector<32x128xi1>, vector<32x128xf32>
    %50 = arith.addf %32, %49 : vector<32x128xf32>
    %51 = arith.mulf %50, %28 : vector<32x128xf32>
    %52 = vector.shape_cast %51 : vector<32x128xf32> to vector<1x32x128xf32>
    %cst_21 = arith.constant dense<0.000000e+00> : vector<1xf32>
    %53 = vector.multi_reduction <add>, %52, %cst_21 [1, 2] : vector<1x32x128xf32> to vector<1xf32>
    %54 = vector.shape_cast %53 : vector<1xf32> to vector<1x1x1xf32>
    %55 = vector.extract %54[0, 0, 0] : f32 from vector<1x1x1xf32>
    %cst_22 = arith.constant 3.200000e+01 : f32
    %56 = arith.divf %55, %cst_22 : f32
    %c0_23 = arith.constant 0 : index
    %c0_24 = arith.constant 0 : index
    %57 = memref.load %arg7[%c0_23, %c0_24] : memref<1x1xf32, #tpu.memory_space<smem>>
    memref.store %56, %arg7[%c0_23, %c0_24] : memref<1x1xf32, #tpu.memory_space<smem>>
    return
  }
}

</mosaic_0001>

<llo_original>
// kernel: skipgram_forward.1
$region0: #{skipgram_forward.1}
  #allocation0 [shape = 'u32[]', space=smem, size = 0x4, offset = 0x4, fixed_abs, tag = 'smem constant byte address 0x4 - core index']
  #allocation1 [shape = 'u32[144,128]{1,0:T(1,128)}', space=vmem, size = 0x12000, scoped, tag = 'internal scratch']
  %s0 = inlined_call_operand.vmem [shape: s32[32,1], index: 0, kind: input, shape index: {}]
  %s1 = inlined_call_operand.vmem [shape: s32[32,1], index: 1, kind: input, shape index: {}]
  %s2 = inlined_call_operand.hbm [shape: f32[128,128], index: 2, kind: input, shape index: {}]
  %s3 = inlined_call_operand.hbm [shape: bf16[128,256], index: 3, kind: input, shape index: {}]
  %s4 = inlined_call_operand.vmem [shape: f32[1,256], index: 4, kind: input, shape index: {}]
  %s5 = inlined_call_operand.hbm [shape: bf16[256,128], index: 5, kind: input, shape index: {}]
  %s6 = inlined_call_operand.vmem [shape: f32[8,256], index: 6, kind: input, shape index: {}]
  %s7 = inlined_call_operand.hbm [shape: f32[1,1], index: 7, kind: output, shape index: {}]
  %s8 = sld [smem:[#allocation0]]
  $region50: #{skipgram_forward.1} parent=0
    _
  %s10 = ssub.s32 1, %s8
  %s11 = scalar_select 0, %s10, %s8
  $region1: #{skipgram_forward.1} parent=0
    #allocation2 [shape = 'u8[65536]{0}', space=vmem, size = 0x10000, scoped, tag = 'input window, operand 2, single buffered']
    #allocation3 [shape = 's32[1]{0}', space=sflag, size = 0x4, scoped, tag = 'scoped memory for skipgram_forward.1']
    #allocation4 [shape = 's32[1]{0}', space=sflag, size = 0x4, scoped, tag = 'scoped memory for skipgram_forward.1']
    #allocation5 [shape = 'u8[65536]{0}', space=vmem, size = 0x10000, scoped, tag = 'input window, operand 3, single buffered']
    #allocation6 [shape = 's32[1]{0}', space=sflag, size = 0x4, scoped, tag = 'scoped memory for skipgram_forward.1']
    #allocation7 [shape = 'u8[65536]{0}', space=vmem, size = 0x10000, scoped, tag = 'input window, operand 5, single buffered']
    #allocation8 [shape = 'u8[512]{0}', space=smem, size = 0x200, scoped, tag = 'output window, operand 0, single buffered']
    %12 = vsyncpa [#allocation3], 0
    %13 = vsyncpa [#allocation6], 0
    %14 = vsyncpa [#allocation4], 0
    // Predicated region
    $region2: #{skipgram_forward.1} parent=1 // pred_check
      _
    $region3: #{skipgram_forward.1} parent=1 // pred_check_branch
      %16 = sbr.rel (0) target = $region5
    $region4: #{skipgram_forward.1} parent=1 // pred_region
      _
    $region5: #{skipgram_forward.1} parent=1 // pred_fallthru
      _
    // Predicated region
    $region6: #{skipgram_forward.1} parent=1 // pred_check
      _
    $region7: #{skipgram_forward.1} parent=1 // pred_check_branch
      %18 = sbr.rel (0) target = $region9
    $region8: #{skipgram_forward.1} parent=1 // pred_region
      _
    $region9: #{skipgram_forward.1} parent=1 // pred_fallthru
      _
    // Predicated region
    $region10: #{skipgram_forward.1} parent=1 // pred_check
      _
    $region11: #{skipgram_forward.1} parent=1 // pred_check_branch
      %20 = sbr.rel (0) target = $region13
    $region12: #{skipgram_forward.1} parent=1 // pred_region
      %s22 = ssub.s32 2048, 2048
      %23 = vsyncadd [#allocation3], %s22
      %s24 = sshll.u32 [#allocation2], 4
      %s25 = int_to_ptr.vmem [resolvable:$true] %s24
      %30 = dma.hbm_to_vmem [thread:$0]  %s2, 2048, %s25, [#allocation3], 128, 128, 8
    $region13: #{skipgram_forward.1} parent=1 // pred_fallthru
      _
    // Predicated region
    $region14: #{skipgram_forward.1} parent=1 // pred_check
      _
    $region15: #{skipgram_forward.1} parent=1 // pred_check_branch
      %32 = sbr.rel (0) target = $region17
    $region16: #{skipgram_forward.1} parent=1 // pred_region
      %s34 = ssub.s32 2048, 2048
      %35 = vsyncadd [#allocation6], %s34
      %s36 = sshll.u32 [#allocation5], 4
      %s37 = int_to_ptr.vmem [resolvable:$true] %s36
      %42 = dma.hbm_to_vmem [thread:$0]  %s3, 2048, %s37, [#allocation6], 128, 128, 8
    $region17: #{skipgram_forward.1} parent=1 // pred_fallthru
      _
    // Predicated region
    $region18: #{skipgram_forward.1} parent=1 // pred_check
      _
    $region19: #{skipgram_forward.1} parent=1 // pred_check_branch
      %44 = sbr.rel (0) target = $region21
    $region20: #{skipgram_forward.1} parent=1 // pred_region
      _
    $region21: #{skipgram_forward.1} parent=1 // pred_fallthru
      _
    // Predicated region
    $region22: #{skipgram_forward.1} parent=1 // pred_check
      _
    $region23: #{skipgram_forward.1} parent=1 // pred_check_branch
      %46 = sbr.rel (0) target = $region25
    $region24: #{skipgram_forward.1} parent=1 // pred_region
      %s48 = ssub.s32 2048, 2048
      %49 = vsyncadd [#allocation6], %s48
      %s50 = sshll.u32 [#allocation7], 4
      %s51 = int_to_ptr.vmem [resolvable:$true] %s50
      %56 = dma.hbm_to_vmem [thread:$0]  %s5, 2048, %s51, [#allocation6], 64, 64, 4
    $region25: #{skipgram_forward.1} parent=1 // pred_fallthru
      _
    // Predicated region
    $region26: #{skipgram_forward.1} parent=1 // pred_check
      _
    $region27: #{skipgram_forward.1} parent=1 // pred_check_branch
      %58 = sbr.rel (0) target = $region29
    $region28: #{skipgram_forward.1} parent=1 // pred_region
      _
    $region29: #{skipgram_forward.1} parent=1 // pred_fallthru
      _
    // Predicated region
    $region30: #{skipgram_forward.1} parent=1 // pred_check
      _
    $region31: #{skipgram_forward.1} parent=1 // pred_check_branch
      %60 = sbr.rel (0) target = $region33
    $region32: #{skipgram_forward.1} parent=1 // pred_region
      %61 = dma.done [#allocation3], 2048
    $region33: #{skipgram_forward.1} parent=1 // pred_fallthru
      _
    // Predicated region
    $region34: #{skipgram_forward.1} parent=1 // pred_check
      _
    $region35: #{skipgram_forward.1} parent=1 // pred_check_branch
      %63 = sbr.rel (0) target = $region37
    $region36: #{skipgram_forward.1} parent=1 // pred_region
      %64 = dma.done [#allocation6], 2048
    $region37: #{skipgram_forward.1} parent=1 // pred_fallthru
      _
    // Predicated region
    $region38: #{skipgram_forward.1} parent=1 // pred_check
      _
    $region39: #{skipgram_forward.1} parent=1 // pred_check_branch
      %66 = sbr.rel (0) target = $region41
    $region40: #{skipgram_forward.1} parent=1 // pred_region
      %67 = dma.done [#allocation6], 2048
    $region41: #{skipgram_forward.1} parent=1 // pred_fallthru
      _
    %v69 = vld [vmem:[%s0] sm:$0xff]
    %v70 = vld [vmem:[%s0 + $0x8] sm:$0xff]
    %v71 = vld [vmem:[%s0 + $0x10] sm:$0xff]
    %v72 = vld [vmem:[%s0 + $0x18] sm:$0xff]
    %v73 = vld [vmem:[%s1] sm:$0xff]
    %v74 = vld [vmem:[%s1 + $0x8] sm:$0xff]
    %v75 = vld [vmem:[%s1 + $0x10] sm:$0xff]
    %v76 = vld [vmem:[%s1 + $0x18] sm:$0xff]
    %v77 = vlaneseq
    %v78 = vand.u32 %v77, 127
    %79 = vset.pattern.permute.xlu0 0
    %80 = vperm.xlu0 %79, %v69
    %v81 = vpop.permute.xlu0 %80
    %82 = vset.pattern.permute.xlu0 0
    %83 = vperm.xlu0 %82, %v70
    %v84 = vpop.permute.xlu0 %83
    %85 = vset.pattern.permute.xlu0 0
    %86 = vperm.xlu0 %85, %v71
    %v87 = vpop.permute.xlu0 %86
    %88 = vset.pattern.permute.xlu0 0
    %89 = vperm.xlu0 %88, %v72
    %v90 = vpop.permute.xlu0 %89
    %vm91 = vcmp.eq.s32.totalorder %v78, %v81
    %vm92 = vcmp.eq.s32.totalorder %v78, %v84
    %vm93 = vcmp.eq.s32.totalorder %v78, %v87
    %vm94 = vcmp.eq.s32.totalorder %v78, %v90
    %v95 = vsel %vm91, 1, 0
    %v96 = vsel %vm92, 1, 0
    %v97 = vsel %vm93, 1, 0
    %v98 = vsel %vm94, 1, 0
    %v99 = vcvt.s32.f32 %v95
    %v100 = vcvt.s32.f32 %v96
    %v101 = vcvt.s32.f32 %v97
    %v102 = vcvt.s32.f32 %v98
    %v103 = vld [vmem:[#allocation2] sm:$0xff]
    %v104 = vld [vmem:[#allocation2 + $0x8] sm:$0xff]
    %v105 = vld [vmem:[#allocation2 + $0x10] sm:$0xff]
    %v106 = vld [vmem:[#allocation2 + $0x18] sm:$0xff]
    %v107 = vld [vmem:[#allocation2 + $0x20] sm:$0xff]
    %v108 = vld [vmem:[#allocation2 + $0x28] sm:$0xff]
    %v109 = vld [vmem:[#allocation2 + $0x30] sm:$0xff]
    %v110 = vld [vmem:[#allocation2 + $0x38] sm:$0xff]
    %v111 = vld [vmem:[#allocation2 + $0x40] sm:$0xff]
    %v112 = vld [vmem:[#allocation2 + $0x48] sm:$0xff]
    %v113 = vld [vmem:[#allocation2 + $0x50] sm:$0xff]
    %v114 = vld [vmem:[#allocation2 + $0x58] sm:$0xff]
    %v115 = vld [vmem:[#allocation2 + $0x60] sm:$0xff]
    %v116 = vld [vmem:[#allocation2 + $0x68] sm:$0xff]
    %v117 = vld [vmem:[#allocation2 + $0x70] sm:$0xff]
    %v118 = vld [vmem:[#allocation2 + $0x78] sm:$0xff]
    %119 = vmatprep.subr.mxu0 0.0
    %120 = vmatpush1.msra.mxu0 %v103
    %121 = vmatprep.subr.mxu0 0.0
    %122 = vmatpush1.msra.mxu0 %v104
    %123 = vmatprep.subr.mxu0 0.0
    %124 = vmatpush1.msra.mxu0 %v105
    %125 = vmatprep.subr.mxu0 0.0
    %126 = vmatpush1.msra.mxu0 %v106
    %127 = vmatprep.subr.mxu0 0.0
    %128 = vmatpush1.msra.mxu0 %v107
    %129 = vmatprep.subr.mxu0 0.0
    %130 = vmatpush1.msra.mxu0 %v108
    %131 = vmatprep.subr.mxu0 0.0
    %132 = vmatpush1.msra.mxu0 %v109
    %133 = vmatprep.subr.mxu0 0.0
    %134 = vmatpush1.msra.mxu0 %v110
    %135 = vmatprep.subr.mxu0 0.0
    %136 = vmatpush1.msra.mxu0 %v111
    %137 = vmatprep.subr.mxu0 0.0
    %138 = vmatpush1.msra.mxu0 %v112
    %139 = vmatprep.subr.mxu0 0.0
    %140 = vmatpush1.msra.mxu0 %v113
    %141 = vmatprep.subr.mxu0 0.0
    %142 = vmatpush1.msra.mxu0 %v114
    %143 = vmatprep.subr.mxu0 0.0
    %144 = vmatpush1.msra.mxu0 %v115
    %145 = vmatprep.subr.mxu0 0.0
    %146 = vmatpush1.msra.mxu0 %v116
    %147 = vmatprep.subr.mxu0 0.0
    %148 = vmatpush1.msra.mxu0 %v117
    %149 = vmatprep.subr.mxu0 0.0
    %150 = vmatpush1.msra.mxu0 %v118
    %151 = vmatprep.subr.mxu0 0.0
    %152 = vmatpush1.msra.mxu0 0.0
    %153 = vmatprep.subr.mxu0 0.0
    %154 = vmatpush1.msra.mxu0 0.0
    %155 = vmatprep.subr.mxu0 0.0
    %156 = vmatpush1.msra.mxu0 0.0
    %157 = vmatprep.subr.mxu0 0.0
    %158 = vmatpush1.msra.mxu0 0.0
    %159 = vmatprep.subr.mxu0 0.0
    %160 = vmatpush1.msra.mxu0 0.0
    %161 = vmatprep.subr.mxu0 0.0
    %162 = vmatpush1.msra.mxu0 0.0
    %163 = vmatprep.subr.mxu0 0.0
    %164 = vmatpush1.msra.mxu0 0.0
    %165 = vmatprep.subr.mxu0 0.0
    %166 = vmatpush1.msra.mxu0 0.0
    %167 = vmatprep.subr.mxu0 0.0
    %168 = vmatpush1.msra.mxu0 0.0
    %169 = vmatprep.subr.mxu0 0.0
    %170 = vmatpush1.msra.mxu0 0.0
    %171 = vmatprep.subr.mxu0 0.0
    %172 = vmatpush1.msra.mxu0 0.0
    %173 = vmatprep.subr.mxu0 0.0
    %174 = vmatpush1.msra.mxu0 0.0
    %175 = vmatprep.subr.mxu0 0.0
    %176 = vmatpush1.msra.mxu0 0.0
    %177 = vmatprep.subr.mxu0 0.0
    %178 = vmatpush1.msra.mxu0 0.0
    %179 = vmatprep.subr.mxu0 0.0
    %180 = vmatpush1.msra.mxu0 0.0
    %181 = vmatprep.subr.mxu0 0.0
    %182 = vmatpush1.msra.mxu0 0.0
    %183 = vmatprep.mubr.f32.mxu0 0.0
    %184 = vmatmul.mubr.f32.gmra.mrb[0].mxu0 %v99
    %v185 = vpop.f32.mrb[0].mxu0
    %v186 = vadd.f32 0.0, %v185
    %v187 = vpop.f32.mrb[0].mxu0
    %188 = vmatprep.mubr.f32.mxu0 0.0
    %189 = vmatmul.mubr.f32.gmra.mrb[0].mxu0 %v100
    %v190 = vpop.f32.mrb[0].mxu0
    %v191 = vadd.f32 0.0, %v190
    %v192 = vpop.f32.mrb[0].mxu0
    %193 = vmatprep.mubr.f32.mxu0 0.0
    %194 = vmatmul.mubr.f32.gmra.mrb[0].mxu0 %v101
    %v195 = vpop.f32.mrb[0].mxu0
    %v196 = vadd.f32 0.0, %v195
    %v197 = vpop.f32.mrb[0].mxu0
    %198 = vmatprep.mubr.f32.mxu0 0.0
    %199 = vmatmul.mubr.f32.gmra.mrb[0].mxu0 %v102
    %v200 = vpop.f32.mrb[0].mxu0
    %v201 = vadd.f32 0.0, %v200
    %v202 = vpop.f32.mrb[0].mxu0
    %203 = vdwg.mxu0
    %v204 = vpack.c.bf16 %v191, %v186
    %v205 = vpack.c.bf16 %v201, %v196
    %v206 = vld [vmem:[#allocation5] sm:$0xff]
    %v207 = vld [vmem:[#allocation5 + $0x8] sm:$0xff]
    %v208 = vld [vmem:[#allocation5 + $0x10] sm:$0xff]
    %v209 = vld [vmem:[#allocation5 + $0x18] sm:$0xff]
    %v210 = vld [vmem:[#allocation5 + $0x20] sm:$0xff]
    %v211 = vld [vmem:[#allocation5 + $0x28] sm:$0xff]
    %v212 = vld [vmem:[#allocation5 + $0x30] sm:$0xff]
    %v213 = vld [vmem:[#allocation5 + $0x38] sm:$0xff]
    %v214 = vld [vmem:[#allocation5 + $0x40] sm:$0xff]
    %v215 = vld [vmem:[#allocation5 + $0x48] sm:$0xff]
    %v216 = vld [vmem:[#allocation5 + $0x50] sm:$0xff]
    %v217 = vld [vmem:[#allocation5 + $0x58] sm:$0xff]
    %v218 = vld [vmem:[#allocation5 + $0x60] sm:$0xff]
    %v219 = vld [vmem:[#allocation5 + $0x68] sm:$0xff]
    %v220 = vld [vmem:[#allocation5 + $0x70] sm:$0xff]
    %v221 = vld [vmem:[#allocation5 + $0x78] sm:$0xff]
    %v222 = vld [vmem:[%s4] sm:$0x3]
    %v224 = vlaneseq
    %v225 = vshrl.u32 %v224, 7
    %v226 = vsub.s32 0, %v225
    %v227 = vrot.slane %v222, %v226
    %v228 = vlaneseq
    %v229 = vshrl.u32 %v228, 7
    %v230 = vsub.s32 1, %v229
    %v231 = vrot.slane %v222, %v230
    %v250 = vunpack.c.l.b16 %v206
    %v251 = vunpack.c.h.b16 %v206
    %v252 = vunpack.c.l.b16 %v207
    %v253 = vunpack.c.h.b16 %v207
    %v254 = vunpack.c.l.b16 %v208
    %v255 = vunpack.c.h.b16 %v208
    %v256 = vunpack.c.l.b16 %v209
    %v257 = vunpack.c.h.b16 %v209
    %v258 = vunpack.c.l.b16 %v210
    %v259 = vunpack.c.h.b16 %v210
    %v260 = vunpack.c.l.b16 %v211
    %v261 = vunpack.c.h.b16 %v211
    %v262 = vunpack.c.l.b16 %v212
    %v263 = vunpack.c.h.b16 %v212
    %v264 = vunpack.c.l.b16 %v213
    %v265 = vunpack.c.h.b16 %v213
    %v266 = vunpack.c.l.b16 %v214
    %v267 = vunpack.c.h.b16 %v214
    %v268 = vunpack.c.l.b16 %v215
    %v269 = vunpack.c.h.b16 %v215
    %v270 = vunpack.c.l.b16 %v216
    %v271 = vunpack.c.h.b16 %v216
    %v272 = vunpack.c.l.b16 %v217
    %v273 = vunpack.c.h.b16 %v217
    %v274 = vunpack.c.l.b16 %v218
    %v275 = vunpack.c.h.b16 %v218
    %v276 = vunpack.c.l.b16 %v219
    %v277 = vunpack.c.h.b16 %v219
    %v278 = vunpack.c.l.b16 %v220
    %v279 = vunpack.c.h.b16 %v220
    %v280 = vunpack.c.l.b16 %v221
    %v281 = vunpack.c.h.b16 %v221
    %v282 = vpack.c.b16 %v252, %v250
    %v283 = vpack.c.b16 %v253, %v251
    %v284 = vpack.c.b16 %v256, %v254
    %v285 = vpack.c.b16 %v257, %v255
    %v286 = vpack.c.b16 %v260, %v258
    %v287 = vpack.c.b16 %v261, %v259
    %v288 = vpack.c.b16 %v264, %v262
    %v289 = vpack.c.b16 %v265, %v263
    %v290 = vpack.c.b16 %v268, %v266
    %v291 = vpack.c.b16 %v269, %v267
    %v292 = vpack.c.b16 %v272, %v270
    %v293 = vpack.c.b16 %v273, %v271
    %v294 = vpack.c.b16 %v276, %v274
    %v295 = vpack.c.b16 %v277, %v275
    %v296 = vpack.c.b16 %v280, %v278
    %v297 = vpack.c.b16 %v281, %v279
    %314 = vmatprep.subr.bf16.mxu0 %v283
    %315 = vmatpush1.bf16.msra.mxu0 %v282
    %316 = vmatprep.subr.bf16.mxu0 %v285
    %317 = vmatpush1.bf16.msra.mxu0 %v284
    %318 = vmatprep.subr.bf16.mxu0 %v287
    %319 = vmatpush1.bf16.msra.mxu0 %v286
    %320 = vmatprep.subr.bf16.mxu0 %v289
    %321 = vmatpush1.bf16.msra.mxu0 %v288
    %322 = vmatprep.subr.bf16.mxu0 %v291
    %323 = vmatpush1.bf16.msra.mxu0 %v290
    %324 = vmatprep.subr.bf16.mxu0 %v293
    %325 = vmatpush1.bf16.msra.mxu0 %v292
    %326 = vmatprep.subr.bf16.mxu0 %v295
    %327 = vmatpush1.bf16.msra.mxu0 %v294
    %328 = vmatprep.subr.bf16.mxu0 %v297
    %329 = vmatpush1.bf16.msra.mxu0 %v296
    %330 = vmatprep.subr.bf16.mxu0 0
    %331 = vmatpush1.bf16.msra.mxu0 0
    %332 = vmatprep.subr.bf16.mxu0 0
    %333 = vmatpush1.bf16.msra.mxu0 0
    %334 = vmatprep.subr.bf16.mxu0 0
    %335 = vmatpush1.bf16.msra.mxu0 0
    %336 = vmatprep.subr.bf16.mxu0 0
    %337 = vmatpush1.bf16.msra.mxu0 0
    %338 = vmatprep.subr.bf16.mxu0 0
    %339 = vmatpush1.bf16.msra.mxu0 0
    %340 = vmatprep.subr.bf16.mxu0 0
    %341 = vmatpush1.bf16.msra.mxu0 0
    %342 = vmatprep.subr.bf16.mxu0 0
    %343 = vmatpush1.bf16.msra.mxu0 0
    %344 = vmatprep.subr.bf16.mxu0 0
    %345 = vmatpush1.bf16.msra.mxu0 0
    %346 = vmatprep.mubr.bf16.mxu0 0
    %347 = vmatmul.mubr.bf16.gmra.mrb[0].mxu0 %v204
    %v348 = vpop.f32.mrb[0].mxu0
    %v349 = vadd.f32 %v227, %v348
    %v350 = vpop.f32.mrb[0].mxu0
    %v351 = vadd.f32 %v231, %v350
    %v352 = vpop.f32.mrb[0].mxu0
    %v353 = vadd.f32 %v227, %v352
    %v354 = vpop.f32.mrb[0].mxu0
    %v355 = vadd.f32 %v231, %v354
    %356 = vmatprep.mubr.bf16.mxu0 0
    %357 = vmatmul.mubr.bf16.gmra.mrb[0].mxu0 %v205
    %v358 = vpop.f32.mrb[0].mxu0
    %v359 = vadd.f32 %v227, %v358
    %v360 = vpop.f32.mrb[0].mxu0
    %v361 = vadd.f32 %v231, %v360
    %v362 = vpop.f32.mrb[0].mxu0
    %v363 = vadd.f32 %v227, %v362
    %v364 = vpop.f32.mrb[0].mxu0
    %v365 = vadd.f32 %v231, %v364
    %366 = vdwg.mxu0
    %v367 = vmax.f32 %v349, 0.0
    %v368 = vmax.f32 %v351, 0.0
    %v369 = vmax.f32 %v353, 0.0
    %v370 = vmax.f32 %v355, 0.0
    %v371 = vmax.f32 %v359, 0.0
    %v372 = vmax.f32 %v361, 0.0
    %v373 = vmax.f32 %v363, 0.0
    %v374 = vmax.f32 %v365, 0.0
    %v375 = vpack.c.bf16 %v369, %v367
    %v376 = vpack.c.bf16 %v370, %v368
    %v377 = vpack.c.bf16 %v373, %v371
    %v378 = vpack.c.bf16 %v374, %v372
    %v379 = vld [vmem:[#allocation7] sm:$0xf]
    %v380 = vld [vmem:[#allocation7 + $0x4] sm:$0xf]
    %v381 = vld [vmem:[#allocation7 + $0x8] sm:$0xf]
    %v382 = vld [vmem:[#allocation7 + $0xc] sm:$0xf]
    %v383 = vld [vmem:[#allocation7 + $0x10] sm:$0xf]
    %v384 = vld [vmem:[#allocation7 + $0x14] sm:$0xf]
    %v385 = vld [vmem:[#allocation7 + $0x18] sm:$0xf]
    %v386 = vld [vmem:[#allocation7 + $0x1c] sm:$0xf]
    %v387 = vld [vmem:[#allocation7 + $0x20] sm:$0xf]
    %v388 = vld [vmem:[#allocation7 + $0x24] sm:$0xf]
    %v389 = vld [vmem:[#allocation7 + $0x28] sm:$0xf]
    %v390 = vld [vmem:[#allocation7 + $0x2c] sm:$0xf]
    %v391 = vld [vmem:[#allocation7 + $0x30] sm:$0xf]
    %v392 = vld [vmem:[#allocation7 + $0x34] sm:$0xf]
    %v393 = vld [vmem:[#allocation7 + $0x38] sm:$0xf]
    %v394 = vld [vmem:[#allocation7 + $0x3c] sm:$0xf]
    %v395 = vld [vmem:[#allocation7 + $0x40] sm:$0xf]
    %v396 = vld [vmem:[#allocation7 + $0x44] sm:$0xf]
    %v397 = vld [vmem:[#allocation7 + $0x48] sm:$0xf]
    %v398 = vld [vmem:[#allocation7 + $0x4c] sm:$0xf]
    %v399 = vld [vmem:[#allocation7 + $0x50] sm:$0xf]
    %v400 = vld [vmem:[#allocation7 + $0x54] sm:$0xf]
    %v401 = vld [vmem:[#allocation7 + $0x58] sm:$0xf]
    %v402 = vld [vmem:[#allocation7 + $0x5c] sm:$0xf]
    %v403 = vld [vmem:[#allocation7 + $0x60] sm:$0xf]
    %v404 = vld [vmem:[#allocation7 + $0x64] sm:$0xf]
    %v405 = vld [vmem:[#allocation7 + $0x68] sm:$0xf]
    %v406 = vld [vmem:[#allocation7 + $0x6c] sm:$0xf]
    %v407 = vld [vmem:[#allocation7 + $0x70] sm:$0xf]
    %v408 = vld [vmem:[#allocation7 + $0x74] sm:$0xf]
    %v409 = vld [vmem:[#allocation7 + $0x78] sm:$0xf]
    %v410 = vld [vmem:[#allocation7 + $0x7c] sm:$0xf]
    %v443 = vunpack.c.l.b16 %v379
    %v444 = vunpack.c.l.b16 %v380
    %v445 = vunpack.c.l.b16 %v381
    %v446 = vunpack.c.l.b16 %v382
    %v447 = vunpack.c.l.b16 %v383
    %v448 = vunpack.c.l.b16 %v384
    %v449 = vunpack.c.l.b16 %v385
    %v450 = vunpack.c.l.b16 %v386
    %v451 = vunpack.c.l.b16 %v387
    %v452 = vunpack.c.l.b16 %v388
    %v453 = vunpack.c.l.b16 %v389
    %v454 = vunpack.c.l.b16 %v390
    %v455 = vunpack.c.l.b16 %v391
    %v456 = vunpack.c.l.b16 %v392
    %v457 = vunpack.c.l.b16 %v393
    %v458 = vunpack.c.l.b16 %v394
    %v459 = vunpack.c.l.b16 %v395
    %v460 = vunpack.c.l.b16 %v396
    %v461 = vunpack.c.l.b16 %v397
    %v462 = vunpack.c.l.b16 %v398
    %v463 = vunpack.c.l.b16 %v399
    %v464 = vunpack.c.l.b16 %v400
    %v465 = vunpack.c.l.b16 %v401
    %v466 = vunpack.c.l.b16 %v402
    %v467 = vunpack.c.l.b16 %v403
    %v468 = vunpack.c.l.b16 %v404
    %v469 = vunpack.c.l.b16 %v405
    %v470 = vunpack.c.l.b16 %v406
    %v471 = vunpack.c.l.b16 %v407
    %v472 = vunpack.c.l.b16 %v408
    %v473 = vunpack.c.l.b16 %v409
    %v474 = vunpack.c.l.b16 %v410
    %v475 = vpack.c.b16 %v444, %v443
    %v476 = vpack.c.b16 %v446, %v445
    %v477 = vpack.c.b16 %v448, %v447
    %v478 = vpack.c.b16 %v450, %v449
    %v479 = vpack.c.b16 %v452, %v451
    %v480 = vpack.c.b16 %v454, %v453
    %v481 = vpack.c.b16 %v456, %v455
    %v482 = vpack.c.b16 %v458, %v457
    %v483 = vpack.c.b16 %v460, %v459
    %v484 = vpack.c.b16 %v462, %v461
    %v485 = vpack.c.b16 %v464, %v463
    %v486 = vpack.c.b16 %v466, %v465
    %v487 = vpack.c.b16 %v468, %v467
    %v488 = vpack.c.b16 %v470, %v469
    %v489 = vpack.c.b16 %v472, %v471
    %v490 = vpack.c.b16 %v474, %v473
    %507 = vmatprep.subr.bf16.mxu0 0
    %508 = vmatpush1.bf16.msra.mxu0 %v475
    %509 = vmatprep.subr.bf16.mxu0 0
    %510 = vmatpush1.bf16.msra.mxu0 %v476
    %511 = vmatprep.subr.bf16.mxu0 0
    %512 = vmatpush1.bf16.msra.mxu0 %v477
    %513 = vmatprep.subr.bf16.mxu0 0
    %514 = vmatpush1.bf16.msra.mxu0 %v478
    %515 = vmatprep.subr.bf16.mxu0 0
    %516 = vmatpush1.bf16.msra.mxu0 %v479
    %517 = vmatprep.subr.bf16.mxu0 0
    %518 = vmatpush1.bf16.msra.mxu0 %v480
    %519 = vmatprep.subr.bf16.mxu0 0
    %520 = vmatpush1.bf16.msra.mxu0 %v481
    %521 = vmatprep.subr.bf16.mxu0 0
    %522 = vmatpush1.bf16.msra.mxu0 %v482
    %523 = vmatprep.subr.bf16.mxu0 0
    %524 = vmatpush1.bf16.msra.mxu0 %v483
    %525 = vmatprep.subr.bf16.mxu0 0
    %526 = vmatpush1.bf16.msra.mxu0 %v484
    %527 = vmatprep.subr.bf16.mxu0 0
    %528 = vmatpush1.bf16.msra.mxu0 %v485
    %529 = vmatprep.subr.bf16.mxu0 0
    %530 = vmatpush1.bf16.msra.mxu0 %v486
    %531 = vmatprep.subr.bf16.mxu0 0
    %532 = vmatpush1.bf16.msra.mxu0 %v487
    %533 = vmatprep.subr.bf16.mxu0 0
    %534 = vmatpush1.bf16.msra.mxu0 %v488
    %535 = vmatprep.subr.bf16.mxu0 0
    %536 = vmatpush1.bf16.msra.mxu0 %v489
    %537 = vmatprep.subr.bf16.mxu0 0
    %538 = vmatpush1.bf16.msra.mxu0 %v490
    %539 = vmatprep.mubr.bf16.mxu0 %v376
    %540 = vmatmul.mubr.bf16.gmra.mrb[0].mxu0 %v375
    %v541 = vpop.f32.mrb[0].mxu0
    %v542 = vadd.f32 0.0, %v541
    %v543 = vpop.f32.mrb[0].mxu0
    %v544 = vpop.f32.mrb[0].mxu0
    %v545 = vadd.f32 0.0, %v544
    %v546 = vpop.f32.mrb[0].mxu0
    %547 = vmatprep.mubr.bf16.mxu0 %v378
    %548 = vmatmul.mubr.bf16.gmra.mrb[0].mxu0 %v377
    %v549 = vpop.f32.mrb[0].mxu0
    %v550 = vadd.f32 0.0, %v549
    %v551 = vpop.f32.mrb[0].mxu0
    %v552 = vpop.f32.mrb[0].mxu0
    %v553 = vadd.f32 0.0, %v552
    %v554 = vpop.f32.mrb[0].mxu0
    %555 = vdwg.mxu0
    %556 = vset.pattern.permute.xlu0 0
    %557 = vperm.xlu0 %556, %v73
    %v558 = vpop.permute.xlu0 %557
    %559 = vset.pattern.permute.xlu0 0
    %560 = vperm.xlu0 %559, %v74
    %v561 = vpop.permute.xlu0 %560
    %562 = vset.pattern.permute.xlu0 0
    %563 = vperm.xlu0 %562, %v75
    %v564 = vpop.permute.xlu0 %563
    %565 = vset.pattern.permute.xlu0 0
    %566 = vperm.xlu0 %565, %v76
    %v567 = vpop.permute.xlu0 %566
    %vm568 = vcmp.eq.s32.totalorder %v78, %v558
    %vm569 = vcmp.eq.s32.totalorder %v78, %v561
    %vm570 = vcmp.eq.s32.totalorder %v78, %v564
    %vm571 = vcmp.eq.s32.totalorder %v78, %v567
    %v572 = vsel %vm568, 1, 0
    %v573 = vsel %vm569, 1, 0
    %v574 = vsel %vm570, 1, 0
    %v575 = vsel %vm571, 1, 0
    %v576 = vcvt.s32.f32 %v572
    %v577 = vcvt.s32.f32 %v573
    %v578 = vcvt.s32.f32 %v574
    %v579 = vcvt.s32.f32 %v575
    %v580 = vld [vmem:[%s6] sm:$0xff]
    %v581 = vld [vmem:[%s6 + $0x8] sm:$0xff]
    %vm582 = vcmask 64512
    %v584 = vsel %vm582, %v576, 0
    %v587 = vsel %vm582, %v577, 0
    %v590 = vsel %vm582, %v578, 0
    %v593 = vsel %vm582, %v579, 0
    %595 = vmatprep.subr.mxu0 %v581
    %596 = vmatpush1.msra.mxu0 %v580
    %597 = vmatprep.subr.mxu0 0.0
    %598 = vmatpush1.msra.mxu0 0.0
    %599 = vmatprep.subr.mxu0 0.0
    %600 = vmatpush1.msra.mxu0 0.0
    %601 = vmatprep.subr.mxu0 0.0
    %602 = vmatpush1.msra.mxu0 0.0
    %603 = vmatprep.subr.mxu0 0.0
    %604 = vmatpush1.msra.mxu0 0.0
    %605 = vmatprep.subr.mxu0 0.0
    %606 = vmatpush1.msra.mxu0 0.0
    %607 = vmatprep.subr.mxu0 0.0
    %608 = vmatpush1.msra.mxu0 0.0
    %609 = vmatprep.subr.mxu0 0.0
    %610 = vmatpush1.msra.mxu0 0.0
    %611 = vmatprep.subr.mxu0 0.0
    %612 = vmatpush1.msra.mxu0 0.0
    %613 = vmatprep.subr.mxu0 0.0
    %614 = vmatpush1.msra.mxu0 0.0
    %615 = vmatprep.subr.mxu0 0.0
    %616 = vmatpush1.msra.mxu0 0.0
    %617 = vmatprep.subr.mxu0 0.0
    %618 = vmatpush1.msra.mxu0 0.0
    %619 = vmatprep.subr.mxu0 0.0
    %620 = vmatpush1.msra.mxu0 0.0
    %621 = vmatprep.subr.mxu0 0.0
    %622 = vmatpush1.msra.mxu0 0.0
    %623 = vmatprep.subr.mxu0 0.0
    %624 = vmatpush1.msra.mxu0 0.0
    %625 = vmatprep.subr.mxu0 0.0
    %626 = vmatpush1.msra.mxu0 0.0
    %627 = vmatprep.subr.mxu0 0.0
    %628 = vmatpush1.msra.mxu0 0.0
    %629 = vmatprep.subr.mxu0 0.0
    %630 = vmatpush1.msra.mxu0 0.0
    %631 = vmatprep.subr.mxu0 0.0
    %632 = vmatpush1.msra.mxu0 0.0
    %633 = vmatprep.subr.mxu0 0.0
    %634 = vmatpush1.msra.mxu0 0.0
    %635 = vmatprep.subr.mxu0 0.0
    %636 = vmatpush1.msra.mxu0 0.0
    %637 = vmatprep.subr.mxu0 0.0
    %638 = vmatpush1.msra.mxu0 0.0
    %639 = vmatprep.subr.mxu0 0.0
    %640 = vmatpush1.msra.mxu0 0.0
    %641 = vmatprep.subr.mxu0 0.0
    %642 = vmatpush1.msra.mxu0 0.0
    %643 = vmatprep.subr.mxu0 0.0
    %644 = vmatpush1.msra.mxu0 0.0
    %645 = vmatprep.subr.mxu0 0.0
    %646 = vmatpush1.msra.mxu0 0.0
    %647 = vmatprep.subr.mxu0 0.0
    %648 = vmatpush1.msra.mxu0 0.0
    %649 = vmatprep.subr.mxu0 0.0
    %650 = vmatpush1.msra.mxu0 0.0
    %651 = vmatprep.subr.mxu0 0.0
    %652 = vmatpush1.msra.mxu0 0.0
    %653 = vmatprep.subr.mxu0 0.0
    %654 = vmatpush1.msra.mxu0 0.0
    %655 = vmatprep.subr.mxu0 0.0
    %656 = vmatpush1.msra.mxu0 0.0
    %657 = vmatprep.subr.mxu0 0.0
    %658 = vmatpush1.msra.mxu0 0.0
    %659 = vmatprep.mubr.f32.mxu0 0.0
    %660 = vmatmul.mubr.f32.gmra.mrb[0].mxu0 %v584
    %v661 = vpop.f32.mrb[0].mxu0
    %v662 = vadd.f32 0.0, %v661
    %v663 = vpop.f32.mrb[0].mxu0
    %v664 = vadd.f32 0.0, %v663
    %665 = vmatprep.mubr.f32.mxu0 0.0
    %666 = vmatmul.mubr.f32.gmra.mrb[0].mxu0 %v587
    %v667 = vpop.f32.mrb[0].mxu0
    %v668 = vadd.f32 0.0, %v667
    %v669 = vpop.f32.mrb[0].mxu0
    %v670 = vadd.f32 0.0, %v669
    %671 = vmatprep.mubr.f32.mxu0 0.0
    %672 = vmatmul.mubr.f32.gmra.mrb[0].mxu0 %v590
    %v673 = vpop.f32.mrb[0].mxu0
    %v674 = vadd.f32 0.0, %v673
    %v675 = vpop.f32.mrb[0].mxu0
    %v676 = vadd.f32 0.0, %v675
    %677 = vmatprep.mubr.f32.mxu0 0.0
    %678 = vmatmul.mubr.f32.gmra.mrb[0].mxu0 %v593
    %v679 = vpop.f32.mrb[0].mxu0
    %v680 = vadd.f32 0.0, %v679
    %v681 = vpop.f32.mrb[0].mxu0
    %v682 = vadd.f32 0.0, %v681
    %683 = vdwg.mxu0
    %v684 = vmax.f32 %v542, 0.0
    %v685 = vmax.f32 %v545, 0.0
    %v686 = vmax.f32 %v550, 0.0
    %v687 = vmax.f32 %v553, 0.0
    %v688 = vmul.f32 %v542, %v662
    %v689 = vmul.f32 %v545, %v668
    %v690 = vmul.f32 %v550, %v674
    %v691 = vmul.f32 %v553, %v680
    %v692 = vsub.f32 %v684, %v688
    %v693 = vsub.f32 %v685, %v689
    %v694 = vsub.f32 %v686, %v690
    %v695 = vsub.f32 %v687, %v691
    %v696 = vand.u32 2147483647, %v542
    %v697 = vand.u32 2147483647, %v545
    %v698 = vand.u32 2147483647, %v550
    %v699 = vand.u32 2147483647, %v553
    %v700 = vsub.f32 0.0, %v696
    %v701 = vsub.f32 0.0, %v697
    %v702 = vsub.f32 0.0, %v698
    %v703 = vsub.f32 0.0, %v699
    %v704 = vmax.f32 %v700, 0.0
    %v705 = vmax.f32 %v701, 0.0
    %v706 = vmax.f32 %v702, 0.0
    %v707 = vmax.f32 %v703, 0.0
    %vm708 = vcmp.ne.f32.partialorder %v700, %v700
    %vm709 = vcmp.ne.f32.partialorder %v701, %v701
    %vm710 = vcmp.ne.f32.partialorder %v702, %v702
    %vm711 = vcmp.ne.f32.partialorder %v703, %v703
    %v712 = vadd.f32 %v700, 0.0
    %v713 = vadd.f32 %v701, 0.0
    %v714 = vadd.f32 %v702, 0.0
    %v715 = vadd.f32 %v703, 0.0
    %v716 = vand.u32 2147483647, %v700
    %v717 = vand.u32 2147483647, %v701
    %v718 = vand.u32 2147483647, %v702
    %v719 = vand.u32 2147483647, %v703
    %v720 = vsub.f32 0.0, %v716
    %v721 = vsub.f32 0.0, %v717
    %v722 = vsub.f32 0.0, %v718
    %v723 = vsub.f32 0.0, %v719
    %v724 = vmul.f32 %v720, 1.442695
    %v725 = vpow.pop %v724
    %v726 = vmul.f32 %v721, 1.442695
    %v727 = vpow.pop %v726
    %v728 = vmul.f32 %v722, 1.442695
    %v729 = vpow.pop %v728
    %v730 = vmul.f32 %v723, 1.442695
    %v731 = vpow.pop %v730
    %v732 = vadd.f32 %v725, 1.0
    %v733 = vlog2.pop %v732
    %v734 = vmul.f32 %v733, 0.6931472
    %v735 = vmul.f32 -0.5, %v725
    %v736 = vadd.f32 %v735, 1.0
    %v737 = vmul.f32 %v736, %v725
    %v738 = vand.u32 2147483647, %v725
    %vm739 = vcmp.lt.f32.partialorder %v738, 0.0004427343
    %v740 = vsel %vm739, %v737, %v734
    %v741 = vadd.f32 %v727, 1.0
    %v742 = vlog2.pop %v741
    %v743 = vmul.f32 %v742, 0.6931472
    %v744 = vmul.f32 -0.5, %v727
    %v745 = vadd.f32 %v744, 1.0
    %v746 = vmul.f32 %v745, %v727
    %v747 = vand.u32 2147483647, %v727
    %vm748 = vcmp.lt.f32.partialorder %v747, 0.0004427343
    %v749 = vsel %vm748, %v746, %v743
    %v750 = vadd.f32 %v729, 1.0
    %v751 = vlog2.pop %v750
    %v752 = vmul.f32 %v751, 0.6931472
    %v753 = vmul.f32 -0.5, %v729
    %v754 = vadd.f32 %v753, 1.0
    %v755 = vmul.f32 %v754, %v729
    %v756 = vand.u32 2147483647, %v729
    %vm757 = vcmp.lt.f32.partialorder %v756, 0.0004427343
    %v758 = vsel %vm757, %v755, %v752
    %v759 = vadd.f32 %v731, 1.0
    %v760 = vlog2.pop %v759
    %v761 = vmul.f32 %v760, 0.6931472
    %v762 = vmul.f32 -0.5, %v731
    %v763 = vadd.f32 %v762, 1.0
    %v764 = vmul.f32 %v763, %v731
    %v765 = vand.u32 2147483647, %v731
    %vm766 = vcmp.lt.f32.partialorder %v765, 0.0004427343
    %v767 = vsel %vm766, %v764, %v761
    %v768 = vadd.f32 %v704, %v740
    %v769 = vadd.f32 %v705, %v749
    %v770 = vadd.f32 %v706, %v758
    %v771 = vadd.f32 %v707, %v767
    %v772 = vsel %vm708, %v712, %v768
    %v773 = vsel %vm709, %v713, %v769
    %v774 = vsel %vm710, %v714, %v770
    %v775 = vsel %vm711, %v715, %v771
    %v776 = vadd.f32 %v692, %v772
    %v777 = vadd.f32 %v693, %v773
    %v778 = vadd.f32 %v694, %v774
    %v779 = vadd.f32 %v695, %v775
    %v780 = vmul.f32 %v776, %v664
    %v781 = vmul.f32 %v777, %v670
    %v782 = vmul.f32 %v778, %v676
    %v783 = vmul.f32 %v779, %v682
    %v784 = vadd.f32 %v780, %v781
    %v785 = vadd.f32 %v784, %v782
    %v786 = vadd.f32 %v785, %v783
    %787 = vadd.xlane.f32.xlu0 %v786
    %v788 = vpop.xlane.xlu0 %787
    %v789 = vrot.slane %v788, 4
    %v790 = vadd.f32 %v788, %v789
    %v791 = vrot.slane %v790, 2
    %v792 = vadd.f32 %v790, %v791
    %v793 = vrot.slane %v792, 1
    %v794 = vadd.f32 %v792, %v793
    %s795 = vtos %v794
    %v796 = vrcp.pop 32.0
    %s797 = vtos %v796
    %s798 = smul.f32 %s795, %s797
    %s799 = scalar_lea.smem [#allocation8], 0
    %800 = sst [smem:[%s799]] %s798
    // Predicated region
    $region42: #{skipgram_forward.1} parent=1 // pred_check
      _
    $region43: #{skipgram_forward.1} parent=1 // pred_check_branch
      %802 = sbr.rel (0) target = $region45
    $region44: #{skipgram_forward.1} parent=1 // pred_region
      %s804 = ssub.s32 16, 16
      %805 = vsyncadd [#allocation4], %s804
      %808 = dma.smem_to_hbm [#allocation8], 16, %s7, [#allocation4]
    $region45: #{skipgram_forward.1} parent=1 // pred_fallthru
      _
    // Predicated region
    $region46: #{skipgram_forward.1} parent=1 // pred_check
      _
    $region47: #{skipgram_forward.1} parent=1 // pred_check_branch
      %810 = sbr.rel (0) target = $region49
    $region48: #{skipgram_forward.1} parent=1 // pred_region
      %811 = dma.done [#allocation4], 16
    $region49: #{skipgram_forward.1} parent=1 // pred_fallthru
      _
    %812 = sfence
    %813 = vsyncpa [#allocation3], 1
    %814 = vsyncpa [#allocation6], 1
    %815 = vsyncpa [#allocation4], 1

</llo_original>
